<compile_context>
chip_gen: v7x
topology: tpu7x:2x2x1
jax: 0.10.0
libtpu: 0.0.40
codegen_flags: <defaults>
</compile_context>

<pallas_src>
import functools
import math

import jax
import jax.numpy as jnp
from jax.experimental import pallas as pl
from jax.experimental.pallas import tpu as pltpu


# ----------------------------------------------------------------------------
# Helpers
# ----------------------------------------------------------------------------
def _vmem_limit_bytes():
    """Generation-aware VMEM cap: ~75% of physical VMEM, fallback 48 MiB."""
    try:
        cap = pltpu.get_tpu_info().vmem_capacity_bytes
    except Exception:  # only guards the hardware-info query, never the kernel
        cap = 64 * 1024 * 1024
    return int(cap) * 3 // 4


def _pick_tile(n, candidates):
    """Largest tile from `candidates` dividing n; whole-n if n is small."""
    if n <= candidates[0]:
        return n
    for t in candidates:
        if n % t == 0:
            return t
    # TODO(synk): non-divisible n should use a pl.cdiv grid + masked tail tile
    # instead of a whole-extent block (can exceed VMEM for very large n).
    return n


def _pack_params(params, num_heads):
    """bf16 MXU weights / f32 biases; 1/sqrt(d_k) folded into Wq, bq."""
    D = params["wq"].shape[0]
    d_k = D // num_heads
    scale = 1.0 / math.sqrt(d_k)
    return dict(
        wq=(params["wq"] * scale).astype(jnp.bfloat16),
        bq=(params["bq"] * scale).astype(jnp.float32),
        wk=params["wk"].astype(jnp.bfloat16),
        bk=params["bk"].astype(jnp.float32),
        wv=params["wv"].astype(jnp.bfloat16),
        bv=params["bv"].astype(jnp.float32),
        wo=params["wo"].astype(jnp.bfloat16),
        bo=params["bo"].astype(jnp.float32),
    )


# ----------------------------------------------------------------------------
# Phase 1: Q/K/V projections (full-width, computed exactly once per token)
# ----------------------------------------------------------------------------
def _qkv_proj_kernel(xq_ref, xk_ref, xv_ref,
                     wq_ref, bq_ref, wk_ref, bk_ref, wv_ref, bv_ref,
                     qp_ref, kp_ref, vp_ref):
    """One grid step = one row tile of B*S tokens.

    x*_ref : (TM, D) bf16   w*_ref : (D, D) bf16   b*_ref : (1, D) f32
    outputs: (TM, D) bf16   (wq/bq are pre-scaled by 1/sqrt(d_k))
    """
    def proj(x_ref, w_ref, b_ref, o_ref):
        acc = jnp.dot(x_ref[...], w_ref[...],
                      preferred_element_type=jnp.float32)      # (TM, D) f32
        o_ref[...] = (acc + b_ref[...]).astype(o_ref.dtype)

    proj(xq_ref, wq_ref, bq_ref, qp_ref)
    proj(xk_ref, wk_ref, bk_ref, kp_ref)
    proj(xv_ref, wv_ref, bv_ref, vp_ref)


# ----------------------------------------------------------------------------
# Phase 2: attention + fused output projection
# ----------------------------------------------------------------------------
def _attn_kernel(q_ref, k_ref, v_ref, wo_ref, bo_ref, o_ref, attn_ref,
                 *, num_heads, d_k):
    """One grid step = one (batch, query-tile).

    q_ref        : (1, TQ, D) bf16   projected Q (1/sqrt(d_k) already applied)
    k_ref, v_ref : (1, S,  D) bf16   projected K / V
    wo_ref       : (D, D) bf16       bo_ref : (1, D) f32
    o_ref        : (1, TQ, D) f32
    attn_ref     : (TQ, D) bf16 VMEM scratch (combined heads)
    """
    q = q_ref[0]   # (TQ, D) bf16
    k = k_ref[0]   # (S,  D) bf16
    v = v_ref[0]   # (S,  D) bf16

    # TODO(synk): attention mask (mask == 0 -> -1e9) not wired; forward uses mask=None.
    # TODO(synk): for very long S (v7x 64 MiB VMEM) tile K/V with an online
    # softmax so only a (TKV, D) slab of K/V and a (TQ, TKV) score tile are resident.
    # TODO(synk): for large num_heads, switch this static unroll to a head grid
    # axis (or lax.fori_loop) to bound live ranges and weight residency.
    for h in range(num_heads):
        lo, hi = h * d_k, (h + 1) * d_k
        q_h = q[:, lo:hi]                      # (TQ, d_k) bf16
        k_h = k[:, lo:hi]                      # (S,  d_k) bf16
        v_h = v[:, lo:hi]                      # (S,  d_k) bf16

        # Scores: contract last dims directly (no explicit transpose).
        s = jax.lax.dot_general(
            q_h, k_h, dimension_numbers=(((1,), (1,)), ((), ())),
            preferred_element_type=jnp.float32)          # (TQ, S) f32

        # Softmax strictly in f32 (v5e has no bf16 VPU/EUP path).
        m = jnp.max(s, axis=-1, keepdims=True)
        p = jnp.exp(s - m)
        p = p * pl.reciprocal(jnp.sum(p, axis=-1, keepdims=True), approx=True)

        head = jnp.dot(p.astype(jnp.bfloat16), v_h,
                       preferred_element_type=jnp.float32)   # (TQ, d_k) f32

        # combine_heads: write head h at lane offset h*d_k into the scratch.
        attn_ref[:, lo:hi] = head.astype(jnp.bfloat16)

    # Single fused lane-dense output projection (K = D, N = D) + bias.
    out = jnp.dot(attn_ref[...], wo_ref[...],
                  preferred_element_type=jnp.float32) + bo_ref[...]
    o_ref[0] = out.astype(o_ref.dtype)


# ----------------------------------------------------------------------------
# Wrapper
# ----------------------------------------------------------------------------
def multihead_forward(Q, K, V, params, *, num_heads):
    """Pallas-backed forward pass of the MultiHead module (mask=None).

    Q, K, V: (B, S, D) float32
    params: dict with wq/wk/wv/wo (D, D) and bq/bk/bv/bo (1, D), all f32,
            used as y = x @ W + b.
    """
    B, S, D = Q.shape
    assert D % num_heads == 0, "d_model must be divisible by num_heads"
    d_k = D // num_heads

    p = _pack_params(params, num_heads)
    vmem_limit = _vmem_limit_bytes()

    # --------------- Phase 1: Q/K/V projections --------------------------
    n_rows = B * S
    TM = _pick_tile(n_rows, (1024, 512, 256, 128, 64, 32, 16, 8))
    n_m = pl.cdiv(n_rows, TM)

    Qf = Q.reshape(n_rows, D).astype(jnp.bfloat16)
    Kf = K.reshape(n_rows, D).astype(jnp.bfloat16)
    Vf = V.reshape(n_rows, D).astype(jnp.bfloat16)

    x_spec = pl.BlockSpec((TM, D), lambda i: (i, 0))
    w_spec = pl.BlockSpec((D, D), lambda i: (0, 0))
    b_spec = pl.BlockSpec((1, D), lambda i: (0, 0))

    proj_cost = pl.CostEstimate(
        flops=6 * n_rows * D * D,
        transcendentals=0,
        bytes_accessed=int(6 * n_rows * D * 2 + 3 * D * D * 2 + 3 * D * 4))

    qp, kp, vp = pl.pallas_call(
        _qkv_proj_kernel,
        out_shape=tuple(jax.ShapeDtypeStruct((n_rows, D), jnp.bfloat16)
                        for _ in range(3)),
        grid_spec=pltpu.PrefetchScalarGridSpec(
            num_scalar_prefetch=0,
            grid=(n_m,),
            in_specs=[x_spec, x_spec, x_spec,
                      w_spec, b_spec,    # w_q (pre-scaled)
                      w_spec, b_spec,    # w_k
                      w_spec, b_spec],   # w_v
            out_specs=[x_spec, x_spec, x_spec],
        ),
        compiler_params=pltpu.CompilerParams(
            dimension_semantics=("parallel",),
            vmem_limit_bytes=vmem_limit),
        cost_estimate=proj_cost,
    )(Qf, Kf, Vf, p["wq"], p["bq"], p["wk"], p["bk"], p["wv"], p["bv"])

    qp = qp.reshape(B, S, D)
    kp = kp.reshape(B, S, D)
    vp = vp.reshape(B, S, D)

    # --------------- Phase 2: attention + fused output projection --------
    TQ = _pick_tile(S, (512, 256, 128, 64, 32, 16))   # multiples of 16 only
    n_q = pl.cdiv(S, TQ)

    kernel = functools.partial(_attn_kernel, num_heads=num_heads, d_k=d_k)

    attn_cost = pl.CostEstimate(
        flops=B * (4 * S * S * D + 2 * S * D * D),
        transcendentals=B * num_heads * S * S,
        bytes_accessed=int(3 * B * S * D * 2 + D * D * 2 + D * 4
                           + B * S * D * 4))

    q_spec = pl.BlockSpec((1, TQ, D), lambda b, qi: (b, qi, 0))
    kv_spec = pl.BlockSpec((1, S, D), lambda b, qi: (b, 0, 0))
    wo_spec = pl.BlockSpec((D, D), lambda b, qi: (0, 0))
    bo_spec = pl.BlockSpec((1, D), lambda b, qi: (0, 0))
    out_spec = pl.BlockSpec((1, TQ, D), lambda b, qi: (b, qi, 0))

    # TODO(synk): on v7x, request single-buffering for the grid-invariant
    # wo/bo blocks (pipeline_mode=pl.Buffered(1)) once verified on the target
    # jax version; default double-buffering is fine on v5e/v6e.
    return pl.pallas_call(
        kernel,
        out_shape=jax.ShapeDtypeStruct((B, S, D), Q.dtype),
        grid_spec=pltpu.PrefetchScalarGridSpec(
            num_scalar_prefetch=0,
            grid=(B, n_q),
            in_specs=[q_spec, kv_spec, kv_spec, wo_spec, bo_spec],
            out_specs=out_spec,
            scratch_shapes=[pltpu.VMEM((TQ, D), jnp.bfloat16)],
        ),
        compiler_params=pltpu.CompilerParams(
            dimension_semantics=("parallel", "parallel"),
            vmem_limit_bytes=vmem_limit),
        cost_estimate=attn_cost,
    )(qp, kp, vp, p["wo"], p["bo"])


# ----------------------------------------------------------------------------
# Pure-JAX reference & init
# ----------------------------------------------------------------------------
def multihead_reference(Q, K, V, params, *, num_heads):
    """Pure-JAX f32 reference of the intended PyTorch forward (mask=None)."""
    B, S, D = Q.shape
    d_k = D // num_heads

    def lin(x, w, b):
        return x @ w + b

    def split(x):  # (B, S, D) -> (B, H, S, d_k)
        return x.reshape(B, S, num_heads, d_k).transpose(0, 2, 1, 3)

    q = split(lin(Q, params["wq"], params["bq"]))
    k = split(lin(K, params["wk"], params["bk"]))
    v = split(lin(V, params["wv"], params["bv"]))

    scores = jnp.einsum("bhqd,bhkd->bhqk", q, k) / math.sqrt(d_k)
    probs = jax.nn.softmax(scores, axis=-1)
    attn = jnp.einsum("bhqk,bhkd->bhqd", probs, v)
    attn = attn.transpose(0, 2, 1, 3).reshape(B, S, D)  # combine_heads
    return lin(attn, params["wo"], params["bo"])


def init_params(key, d_model):
    """Deterministic nn.Linear-style init (uniform +/- 1/sqrt(fan_in))."""
    bound = 1.0 / math.sqrt(d_model)
    names = ["wq", "bq", "wk", "bk", "wv", "bv", "wo", "bo"]
    keys = jax.random.split(key, len(names))
    params = {}
    for n, k in zip(names, keys):
        shape = (d_model, d_model) if n.startswith("w") else (1, d_model)
        params[n] = jax.random.uniform(
            k, shape, jnp.float32, minval=-bound, maxval=bound)
    return params


if __name__ == "__main__":
    d_model = 32
    num_heads = 4
    batch = 2
    seq = 8

    root = jax.random.PRNGKey(0)
    kq, kk, kv, kp = jax.random.split(root, 4)
    Q = jax.random.normal(kq, (batch, seq, d_model), jnp.float32)
    K = jax.random.normal(kk, (batch, seq, d_model), jnp.float32)
    V = jax.random.normal(kv, (batch, seq, d_model), jnp.float32)
    params = init_params(kp, d_model)

    out = multihead_forward(Q, K, V, params, num_heads=num_heads)
    out = jax.block_until_ready(out)

    ref = multihead_reference(Q, K, V, params, num_heads=num_heads)
    assert out.shape == (batch, seq, d_model)
    # bf16 MXU operands + approx reciprocal -> looser tolerance than pure f32.
    assert jnp.allclose(out, ref, atol=5e-2, rtol=5e-2), "mismatch vs reference"

    print("KERNEL_OK")
</pallas_src>

<mosaic_0001>
module attributes {stable_mosaic.version = 11 : i64} {
  func.func @_qkv_proj_kernel(%arg0: i32, %arg1: memref<16x32xbf16, #tpu.memory_space<vmem>>, %arg2: memref<16x32xbf16, #tpu.memory_space<vmem>>, %arg3: memref<16x32xbf16, #tpu.memory_space<vmem>>, %arg4: memref<32x32xbf16, #tpu.memory_space<vmem>>, %arg5: memref<1x32xf32, #tpu.memory_space<vmem>>, %arg6: memref<32x32xbf16, #tpu.memory_space<vmem>>, %arg7: memref<1x32xf32, #tpu.memory_space<vmem>>, %arg8: memref<32x32xbf16, #tpu.memory_space<vmem>>, %arg9: memref<1x32xf32, #tpu.memory_space<vmem>>, %arg10: memref<16x32xbf16, #tpu.memory_space<vmem>>, %arg11: memref<16x32xbf16, #tpu.memory_space<vmem>>, %arg12: memref<16x32xbf16, #tpu.memory_space<vmem>>) attributes {dimension_semantics = [#tpu.dimension_semantics<parallel>], iteration_bounds = array<i64: 1>, scalar_prefetch = 0 : i64, scratch_operands = 0 : i64, tpu.core_type = #tpu.core_type<tc>, window_params = [{transform_indices = @transform_0, window_bounds = array<i64: 16, 32>}, {transform_indices = @transform_1, window_bounds = array<i64: 16, 32>}, {transform_indices = @transform_2, window_bounds = array<i64: 16, 32>}, {pipeline_mode = #tpu.pipeline_mode<synchronous>, transform_indices = @transform_3, window_bounds = array<i64: 32, 32>}, {pipeline_mode = #tpu.pipeline_mode<synchronous>, transform_indices = @transform_4, window_bounds = array<i64: 1, 32>}, {pipeline_mode = #tpu.pipeline_mode<synchronous>, transform_indices = @transform_5, window_bounds = array<i64: 32, 32>}, {pipeline_mode = #tpu.pipeline_mode<synchronous>, transform_indices = @transform_6, window_bounds = array<i64: 1, 32>}, {pipeline_mode = #tpu.pipeline_mode<synchronous>, transform_indices = @transform_7, window_bounds = array<i64: 32, 32>}, {pipeline_mode = #tpu.pipeline_mode<synchronous>, transform_indices = @transform_8, window_bounds = array<i64: 1, 32>}, {transform_indices = @transform_9, window_bounds = array<i64: 16, 32>}, {transform_indices = @transform_10, window_bounds = array<i64: 16, 32>}, {transform_indices = @transform_11, window_bounds = array<i64: 16, 32>}]} {
    %c0 = arith.constant 0 : index
    %c0_0 = arith.constant 0 : index
    %0 = vector.load %arg1[%c0, %c0_0] : memref<16x32xbf16, #tpu.memory_space<vmem>>, vector<16x32xbf16>
    %c0_1 = arith.constant 0 : index
    %c0_2 = arith.constant 0 : index
    %1 = vector.load %arg4[%c0_1, %c0_2] : memref<32x32xbf16, #tpu.memory_space<vmem>>, vector<32x32xbf16>
    %cst = arith.constant dense<0.000000e+00> : vector<16x32xf32>
    %2 = tpu.matmul %0, %1, %cst {dimension_numbers = #tpu.dot_dimension_numbers<[1], [0], [0], [1], [0, 0, 1, 1], [], []>} : vector<16x32xbf16>, vector<32x32xbf16>, vector<16x32xf32> -> vector<16x32xf32>
    %c0_3 = arith.constant 0 : index
    %c0_4 = arith.constant 0 : index
    %3 = vector.load %arg5[%c0_3, %c0_4] : memref<1x32xf32, #tpu.memory_space<vmem>>, vector<1x32xf32>
    %4 = vector.broadcast %3 : vector<1x32xf32> to vector<16x32xf32>
    %5 = arith.addf %2, %4 : vector<16x32xf32>
    %6 = arith.truncf %5 : vector<16x32xf32> to vector<16x32xbf16>
    %c0_5 = arith.constant 0 : index
    %c0_6 = arith.constant 0 : index
    %7 = vector.load %arg10[%c0_5, %c0_6] : memref<16x32xbf16, #tpu.memory_space<vmem>>, vector<16x32xbf16>
    tpu.vector_store %arg10[%c0_5, %c0_6], %6 {strides = array<i32>} : memref<16x32xbf16, #tpu.memory_space<vmem>>, vector<16x32xbf16>,
    %c0_7 = arith.constant 0 : index
    %c0_8 = arith.constant 0 : index
    %8 = vector.load %arg2[%c0_7, %c0_8] : memref<16x32xbf16, #tpu.memory_space<vmem>>, vector<16x32xbf16>
    %c0_9 = arith.constant 0 : index
    %c0_10 = arith.constant 0 : index
    %9 = vector.load %arg6[%c0_9, %c0_10] : memref<32x32xbf16, #tpu.memory_space<vmem>>, vector<32x32xbf16>
    %cst_11 = arith.constant dense<0.000000e+00> : vector<16x32xf32>
    %10 = tpu.matmul %8, %9, %cst_11 {dimension_numbers = #tpu.dot_dimension_numbers<[1], [0], [0], [1], [0, 0, 1, 1], [], []>} : vector<16x32xbf16>, vector<32x32xbf16>, vector<16x32xf32> -> vector<16x32xf32>
    %c0_12 = arith.constant 0 : index
    %c0_13 = arith.constant 0 : index
    %11 = vector.load %arg7[%c0_12, %c0_13] : memref<1x32xf32, #tpu.memory_space<vmem>>, vector<1x32xf32>
    %12 = vector.broadcast %11 : vector<1x32xf32> to vector<16x32xf32>
    %13 = arith.addf %10, %12 : vector<16x32xf32>
    %14 = arith.truncf %13 : vector<16x32xf32> to vector<16x32xbf16>
    %c0_14 = arith.constant 0 : index
    %c0_15 = arith.constant 0 : index
    %15 = vector.load %arg11[%c0_14, %c0_15] : memref<16x32xbf16, #tpu.memory_space<vmem>>, vector<16x32xbf16>
    tpu.vector_store %arg11[%c0_14, %c0_15], %14 {strides = array<i32>} : memref<16x32xbf16, #tpu.memory_space<vmem>>, vector<16x32xbf16>,
    %c0_16 = arith.constant 0 : index
    %c0_17 = arith.constant 0 : index
    %16 = vector.load %arg3[%c0_16, %c0_17] : memref<16x32xbf16, #tpu.memory_space<vmem>>, vector<16x32xbf16>
    %c0_18 = arith.constant 0 : index
    %c0_19 = arith.constant 0 : index
    %17 = vector.load %arg8[%c0_18, %c0_19] : memref<32x32xbf16, #tpu.memory_space<vmem>>, vector<32x32xbf16>
    %cst_20 = arith.constant dense<0.000000e+00> : vector<16x32xf32>
    %18 = tpu.matmul %16, %17, %cst_20 {dimension_numbers = #tpu.dot_dimension_numbers<[1], [0], [0], [1], [0, 0, 1, 1], [], []>} : vector<16x32xbf16>, vector<32x32xbf16>, vector<16x32xf32> -> vector<16x32xf32>
    %c0_21 = arith.constant 0 : index
    %c0_22 = arith.constant 0 : index
    %19 = vector.load %arg9[%c0_21, %c0_22] : memref<1x32xf32, #tpu.memory_space<vmem>>, vector<1x32xf32>
    %20 = vector.broadcast %19 : vector<1x32xf32> to vector<16x32xf32>
    %21 = arith.addf %18, %20 : vector<16x32xf32>
    %22 = arith.truncf %21 : vector<16x32xf32> to vector<16x32xbf16>
    %c0_23 = arith.constant 0 : index
    %c0_24 = arith.constant 0 : index
    %23 = vector.load %arg12[%c0_23, %c0_24] : memref<16x32xbf16, #tpu.memory_space<vmem>>, vector<16x32xbf16>
    tpu.vector_store %arg12[%c0_23, %c0_24], %22 {strides = array<i32>} : memref<16x32xbf16, #tpu.memory_space<vmem>>, vector<16x32xbf16>,
    return
  }
  func.func @transform_0(%arg0: i32) -> (i32, i32) {
    %c0_i32 = arith.constant 0 : i32
    %c0_i32_0 = arith.constant 0 : i32
    return %arg0, %c0_i32 : i32, i32
  }
  func.func @transform_1(%arg0: i32) -> (i32, i32) {
    %c0_i32 = arith.constant 0 : i32
    %c0_i32_0 = arith.constant 0 : i32
    return %arg0, %c0_i32 : i32, i32
  }
  func.func @transform_2(%arg0: i32) -> (i32, i32) {
    %c0_i32 = arith.constant 0 : i32
    %c0_i32_0 = arith.constant 0 : i32
    return %arg0, %c0_i32 : i32, i32
  }
  func.func @transform_3(%arg0: i32) -> (i32, i32) {
    %c0_i32 = arith.constant 0 : i32
    %c0_i32_0 = arith.constant 0 : i32
    %c0_i32_1 = arith.constant 0 : i32
    return %c0_i32, %c0_i32_0 : i32, i32
  }
  func.func @transform_4(%arg0: i32) -> (i32, i32) {
    %c0_i32 = arith.constant 0 : i32
    %c0_i32_0 = arith.constant 0 : i32
    %c0_i32_1 = arith.constant 0 : i32
    return %c0_i32, %c0_i32_0 : i32, i32
  }
  func.func @transform_5(%arg0: i32) -> (i32, i32) {
    %c0_i32 = arith.constant 0 : i32
    %c0_i32_0 = arith.constant 0 : i32
    %c0_i32_1 = arith.constant 0 : i32
    return %c0_i32, %c0_i32_0 : i32, i32
  }
  func.func @transform_6(%arg0: i32) -> (i32, i32) {
    %c0_i32 = arith.constant 0 : i32
    %c0_i32_0 = arith.constant 0 : i32
    %c0_i32_1 = arith.constant 0 : i32
    return %c0_i32, %c0_i32_0 : i32, i32
  }
  func.func @transform_7(%arg0: i32) -> (i32, i32) {
    %c0_i32 = arith.constant 0 : i32
    %c0_i32_0 = arith.constant 0 : i32
    %c0_i32_1 = arith.constant 0 : i32
    return %c0_i32, %c0_i32_0 : i32, i32
  }
  func.func @transform_8(%arg0: i32) -> (i32, i32) {
    %c0_i32 = arith.constant 0 : i32
    %c0_i32_0 = arith.constant 0 : i32
    %c0_i32_1 = arith.constant 0 : i32
    return %c0_i32, %c0_i32_0 : i32, i32
  }
  func.func @transform_9(%arg0: i32) -> (i32, i32) {
    %c0_i32 = arith.constant 0 : i32
    %c0_i32_0 = arith.constant 0 : i32
    return %arg0, %c0_i32 : i32, i32
  }
  func.func @transform_10(%arg0: i32) -> (i32, i32) {
    %c0_i32 = arith.constant 0 : i32
    %c0_i32_0 = arith.constant 0 : i32
    return %arg0, %c0_i32 : i32, i32
  }
  func.func @transform_11(%arg0: i32) -> (i32, i32) {
    %c0_i32 = arith.constant 0 : i32
    %c0_i32_0 = arith.constant 0 : i32
    return %arg0, %c0_i32 : i32, i32
  }
}

</mosaic_0001>

<llo_original>
// kernel: tpu_custom_call.1
$region0: #{tpu_custom_call.1}
  #allocation0 [shape = 'u32[]', space=smem, size = 0x4, offset = 0x4, fixed_abs, tag = 'smem constant byte address 0x4 - core index']
  #allocation1 [shape = 'u32[144,128]{1,0:T(1,128)}', space=vmem, size = 0x12000, scoped, tag = 'internal scratch']
  %s0 = inlined_call_operand.hbm [shape: bf16[16,32], index: 0, kind: input, shape index: {}]
  %s1 = inlined_call_operand.hbm [shape: bf16[16,32], index: 1, kind: input, shape index: {}]
  %s2 = inlined_call_operand.hbm [shape: bf16[16,32], index: 2, kind: input, shape index: {}]
  %s3 = inlined_call_operand.hbm [shape: bf16[32,32], index: 3, kind: input, shape index: {}]
  %s4 = inlined_call_operand.vmem [shape: f32[1,32], index: 4, kind: input, shape index: {}]
  %s5 = inlined_call_operand.vmem [shape: bf16[32,32], index: 5, kind: input, shape index: {}]
  %s6 = inlined_call_operand.vmem [shape: f32[1,32], index: 6, kind: input, shape index: {}]
  %s7 = inlined_call_operand.hbm [shape: bf16[32,32], index: 7, kind: input, shape index: {}]
  %s8 = inlined_call_operand.vmem [shape: f32[1,32], index: 8, kind: input, shape index: {}]
  %s9 = inlined_call_operand.hbm [shape: bf16[16,32], index: 9, kind: output, shape index: {0}]
  %s10 = inlined_call_operand.hbm [shape: bf16[16,32], index: 10, kind: output, shape index: {1}]
  %s11 = inlined_call_operand.hbm [shape: bf16[16,32], index: 11, kind: output, shape index: {2}]
  %12 = xla_tuple %s9, %s10, %s11
  %s13 = sld [smem:[#allocation0]]
  $region82: #{tpu_custom_call.1} parent=0
    _
  %s15 = ssub.s32 1, %s13
  %s16 = scalar_select 0, %s15, %s13
  $region1: #{tpu_custom_call.1} parent=0
    #allocation2 [shape = 'u8[4096]{0}', space=vmem, size = 0x1000, scoped, tag = 'input window, operand 0, single buffered']
    #allocation3 [shape = 's32[1]{0}', space=sflag, size = 0x4, scoped, tag = 'scoped memory for tpu_custom_call.1']
    #allocation4 [shape = 's32[1]{0}', space=sflag, size = 0x4, scoped, tag = 'scoped memory for tpu_custom_call.1']
    #allocation5 [shape = 'u8[4096]{0}', space=vmem, size = 0x1000, scoped, tag = 'input window, operand 1, single buffered']
    #allocation6 [shape = 's32[1]{0}', space=sflag, size = 0x4, scoped, tag = 'scoped memory for tpu_custom_call.1']
    #allocation7 [shape = 'u8[4096]{0}', space=vmem, size = 0x1000, scoped, tag = 'input window, operand 2, single buffered']
    #allocation8 [shape = 'u8[8192]{0}', space=vmem, size = 0x2000, scoped, tag = 'input window, operand 3, single buffered']
    #allocation9 [shape = 's32[1]{0}', space=sflag, size = 0x4, scoped, tag = 'scoped memory for tpu_custom_call.1']
    #allocation10 [shape = 'u8[8192]{0}', space=vmem, size = 0x2000, scoped, tag = 'input window, operand 7, single buffered']
    #allocation11 [shape = 'u8[4096]{0}', space=vmem, size = 0x1000, scoped, tag = 'output window, operand 0, single buffered']
    #allocation12 [shape = 'u8[4096]{0}', space=vmem, size = 0x1000, scoped, tag = 'output window, operand 1, single buffered']
    #allocation13 [shape = 's32[1]{0}', space=sflag, size = 0x4, scoped, tag = 'scoped memory for tpu_custom_call.1']
    #allocation14 [shape = 'u8[4096]{0}', space=vmem, size = 0x1000, scoped, tag = 'output window, operand 2, single buffered']
    %17 = vsyncpa [#allocation3], 0
    %18 = vsyncpa [#allocation6], 0
    %19 = vsyncpa [#allocation9], 0
    %20 = vsyncpa [#allocation4], 0
    %21 = vsyncpa [#allocation13], 0
    // Predicated region
    $region2: #{tpu_custom_call.1} parent=1 // pred_check
      _
    $region3: #{tpu_custom_call.1} parent=1 // pred_check_branch
      %23 = sbr.rel (0) target = $region5
    $region4: #{tpu_custom_call.1} parent=1 // pred_region
      %s25 = ssub.s32 128, 128
      %26 = vsyncadd [#allocation3], %s25
      %s27 = sshll.u32 [#allocation2], 4
      %s28 = int_to_ptr.vmem [resolvable:$true] %s27
      %33 = dma.hbm_to_vmem [thread:$0]  %s0, 128, %s28, [#allocation3], 64, 64, 4
    $region5: #{tpu_custom_call.1} parent=1 // pred_fallthru
      _
    // Predicated region
    $region6: #{tpu_custom_call.1} parent=1 // pred_check
      _
    $region7: #{tpu_custom_call.1} parent=1 // pred_check_branch
      %35 = sbr.rel (0) target = $region9
    $region8: #{tpu_custom_call.1} parent=1 // pred_region
      %s37 = ssub.s32 128, 128
      %38 = vsyncadd [#allocation6], %s37
      %s39 = sshll.u32 [#allocation5], 4
      %s40 = int_to_ptr.vmem [resolvable:$true] %s39
      %45 = dma.hbm_to_vmem [thread:$0]  %s1, 128, %s40, [#allocation6], 64, 64, 4
    $region9: #{tpu_custom_call.1} parent=1 // pred_fallthru
      _
    // Predicated region
    $region10: #{tpu_custom_call.1} parent=1 // pred_check
      _
    $region11: #{tpu_custom_call.1} parent=1 // pred_check_branch
      %47 = sbr.rel (0) target = $region13
    $region12: #{tpu_custom_call.1} parent=1 // pred_region
      %s49 = ssub.s32 128, 128
      %50 = vsyncadd [#allocation6], %s49
      %s51 = sshll.u32 [#allocation7], 4
      %s52 = int_to_ptr.vmem [resolvable:$true] %s51
      %57 = dma.hbm_to_vmem [thread:$0]  %s2, 128, %s52, [#allocation6], 64, 64, 4
    $region13: #{tpu_custom_call.1} parent=1 // pred_fallthru
      _
    // Predicated region
    $region14: #{tpu_custom_call.1} parent=1 // pred_check
      _
    $region15: #{tpu_custom_call.1} parent=1 // pred_check_branch
      %59 = sbr.rel (0) target = $region17
    $region16: #{tpu_custom_call.1} parent=1 // pred_region
      %s61 = ssub.s32 256, 256
      %62 = vsyncadd [#allocation9], %s61
      %s63 = sshll.u32 [#allocation8], 4
      %s64 = int_to_ptr.vmem [resolvable:$true] %s63
      %69 = dma.hbm_to_vmem [thread:$0]  %s3, 256, %s64, [#allocation9], 64, 64, 4
    $region17: #{tpu_custom_call.1} parent=1 // pred_fallthru
      _
    // Predicated region
    $region18: #{tpu_custom_call.1} parent=1 // pred_check
      _
    $region19: #{tpu_custom_call.1} parent=1 // pred_check_branch
      %71 = sbr.rel (0) target = $region21
    $region20: #{tpu_custom_call.1} parent=1 // pred_region
      _
    $region21: #{tpu_custom_call.1} parent=1 // pred_fallthru
      _
    // Predicated region
    $region22: #{tpu_custom_call.1} parent=1 // pred_check
      _
    $region23: #{tpu_custom_call.1} parent=1 // pred_check_branch
      %73 = sbr.rel (0) target = $region25
    $region24: #{tpu_custom_call.1} parent=1 // pred_region
      _
    $region25: #{tpu_custom_call.1} parent=1 // pred_fallthru
      _
    // Predicated region
    $region26: #{tpu_custom_call.1} parent=1 // pred_check
      _
    $region27: #{tpu_custom_call.1} parent=1 // pred_check_branch
      %75 = sbr.rel (0) target = $region29
    $region28: #{tpu_custom_call.1} parent=1 // pred_region
      _
    $region29: #{tpu_custom_call.1} parent=1 // pred_fallthru
      _
    // Predicated region
    $region30: #{tpu_custom_call.1} parent=1 // pred_check
      _
    $region31: #{tpu_custom_call.1} parent=1 // pred_check_branch
      %77 = sbr.rel (0) target = $region33
    $region32: #{tpu_custom_call.1} parent=1 // pred_region
      %s79 = ssub.s32 256, 256
      %80 = vsyncadd [#allocation9], %s79
      %s81 = sshll.u32 [#allocation10], 4
      %s82 = int_to_ptr.vmem [resolvable:$true] %s81
      %87 = dma.hbm_to_vmem [thread:$0]  %s7, 256, %s82, [#allocation9], 64, 64, 4
    $region33: #{tpu_custom_call.1} parent=1 // pred_fallthru
      _
    // Predicated region
    $region34: #{tpu_custom_call.1} parent=1 // pred_check
      _
    $region35: #{tpu_custom_call.1} parent=1 // pred_check_branch
      %89 = sbr.rel (0) target = $region37
    $region36: #{tpu_custom_call.1} parent=1 // pred_region
      _
    $region37: #{tpu_custom_call.1} parent=1 // pred_fallthru
      _
    // Predicated region
    $region38: #{tpu_custom_call.1} parent=1 // pred_check
      _
    $region39: #{tpu_custom_call.1} parent=1 // pred_check_branch
      %91 = sbr.rel (0) target = $region41
    $region40: #{tpu_custom_call.1} parent=1 // pred_region
      %92 = dma.done [#allocation3], 128
    $region41: #{tpu_custom_call.1} parent=1 // pred_fallthru
      _
    // Predicated region
    $region42: #{tpu_custom_call.1} parent=1 // pred_check
      _
    $region43: #{tpu_custom_call.1} parent=1 // pred_check_branch
      %94 = sbr.rel (0) target = $region45
    $region44: #{tpu_custom_call.1} parent=1 // pred_region
      %95 = dma.done [#allocation6], 128
    $region45: #{tpu_custom_call.1} parent=1 // pred_fallthru
      _
    // Predicated region
    $region46: #{tpu_custom_call.1} parent=1 // pred_check
      _
    $region47: #{tpu_custom_call.1} parent=1 // pred_check_branch
      %97 = sbr.rel (0) target = $region49
    $region48: #{tpu_custom_call.1} parent=1 // pred_region
      %98 = dma.done [#allocation6], 128
    $region49: #{tpu_custom_call.1} parent=1 // pred_fallthru
      _
    // Predicated region
    $region50: #{tpu_custom_call.1} parent=1 // pred_check
      _
    $region51: #{tpu_custom_call.1} parent=1 // pred_check_branch
      %100 = sbr.rel (0) target = $region53
    $region52: #{tpu_custom_call.1} parent=1 // pred_region
      %101 = dma.done [#allocation9], 256
    $region53: #{tpu_custom_call.1} parent=1 // pred_fallthru
      _
    // Predicated region
    $region54: #{tpu_custom_call.1} parent=1 // pred_check
      _
    $region55: #{tpu_custom_call.1} parent=1 // pred_check_branch
      %103 = sbr.rel (0) target = $region57
    $region56: #{tpu_custom_call.1} parent=1 // pred_region
      %104 = dma.done [#allocation9], 256
    $region57: #{tpu_custom_call.1} parent=1 // pred_fallthru
      _
    %v106 = vld [vmem:[#allocation2] sm:$0xf]
    %v107 = vld [vmem:[#allocation2 + $0x4] sm:$0xf]
    %v108 = vld [vmem:[#allocation8] sm:$0xf]
    %v109 = vld [vmem:[#allocation8 + $0x4] sm:$0xf]
    %v110 = vld [vmem:[#allocation8 + $0x8] sm:$0xf]
    %v111 = vld [vmem:[#allocation8 + $0xc] sm:$0xf]
    %v112 = vld [vmem:[%s4] sm:$0x1]
    %v114 = vlaneseq
    %v115 = vshrl.u32 %v114, 7
    %v116 = vsub.s32 0, %v115
    %v117 = vrot.slane %v112, %v116
    %v121 = vunpack.c.l.b16 %v106
    %v122 = vunpack.c.l.b16 %v107
    %v123 = vpack.c.b16 %v122, %v121
    %v128 = vunpack.c.l.b16 %v108
    %v129 = vunpack.c.l.b16 %v109
    %v130 = vunpack.c.l.b16 %v110
    %v131 = vunpack.c.l.b16 %v111
    %v132 = vpack.c.b16 %v129, %v128
    %v133 = vpack.c.b16 %v131, %v130
    %vm136 = vcmask 261120
    %v138 = vsel %vm136, %v123, 0
    %140 = vmatprep.subr.bf16.mxu0 0
    %141 = vmatpush1.bf16.msra.mxu0 %v132
    %142 = vmatprep.subr.bf16.mxu0 0
    %143 = vmatpush1.bf16.msra.mxu0 %v133
    %144 = vmatprep.subr.bf16.mxu0 0
    %145 = vmatpush1.bf16.msra.mxu0 0
    %146 = vmatprep.subr.bf16.mxu0 0
    %147 = vmatpush1.bf16.msra.mxu0 0
    %148 = vmatprep.subr.bf16.mxu0 0
    %149 = vmatpush1.bf16.msra.mxu0 0
    %150 = vmatprep.subr.bf16.mxu0 0
    %151 = vmatpush1.bf16.msra.mxu0 0
    %152 = vmatprep.subr.bf16.mxu0 0
    %153 = vmatpush1.bf16.msra.mxu0 0
    %154 = vmatprep.subr.bf16.mxu0 0
    %155 = vmatpush1.bf16.msra.mxu0 0
    %156 = vmatprep.subr.bf16.mxu0 0
    %157 = vmatpush1.bf16.msra.mxu0 0
    %158 = vmatprep.subr.bf16.mxu0 0
    %159 = vmatpush1.bf16.msra.mxu0 0
    %160 = vmatprep.subr.bf16.mxu0 0
    %161 = vmatpush1.bf16.msra.mxu0 0
    %162 = vmatprep.subr.bf16.mxu0 0
    %163 = vmatpush1.bf16.msra.mxu0 0
    %164 = vmatprep.subr.bf16.mxu0 0
    %165 = vmatpush1.bf16.msra.mxu0 0
    %166 = vmatprep.subr.bf16.mxu0 0
    %167 = vmatpush1.bf16.msra.mxu0 0
    %168 = vmatprep.subr.bf16.mxu0 0
    %169 = vmatpush1.bf16.msra.mxu0 0
    %170 = vmatprep.subr.bf16.mxu0 0
    %171 = vmatpush1.bf16.msra.mxu0 0
    %172 = vmatprep.mubr.bf16.mxu0 0
    %173 = vmatmul.mubr.bf16.gmra.mrb[0].mxu0 %v138
    %v174 = vpop.f32.mrb[0].mxu0
    %v175 = vadd.f32 %v117, %v174
    %v176 = vpop.f32.mrb[0].mxu0
    %v177 = vpop.f32.mrb[0].mxu0
    %v178 = vadd.f32 %v117, %v177
    %v179 = vpop.f32.mrb[0].mxu0
    %180 = vdwg.mxu0
    %v181 = vpack.c.bf16 %v178, %v175
    %v183 = vunpack.c.l.b16 %v181
    %v184 = vunpack.c.h.b16 %v181
    %v185 = vpack.c.b16 %v183, %v183
    %v186 = vpack.c.b16 %v184, %v184
    %vm189 = vcmask 257024
    %190 = vst.msk [vmem:[#allocation11] sm:$0xf] %vm189, %v185
    %191 = vst.msk [vmem:[#allocation11 + $0x4] sm:$0xf] %vm189, %v186
    %v192 = vld [vmem:[#allocation5] sm:$0xf]
    %v193 = vld [vmem:[#allocation5 + $0x4] sm:$0xf]
    %v194 = vld [vmem:[%s5] sm:$0xf]
    %v195 = vld [vmem:[%s5 + $0x4] sm:$0xf]
    %v196 = vld [vmem:[%s5 + $0x8] sm:$0xf]
    %v197 = vld [vmem:[%s5 + $0xc] sm:$0xf]
    %v198 = vld [vmem:[%s6] sm:$0x1]
    %v200 = vlaneseq
    %v201 = vshrl.u32 %v200, 7
    %v202 = vsub.s32 0, %v201
    %v203 = vrot.slane %v198, %v202
    %v207 = vunpack.c.l.b16 %v192
    %v208 = vunpack.c.l.b16 %v193
    %v209 = vpack.c.b16 %v208, %v207
    %v214 = vunpack.c.l.b16 %v194
    %v215 = vunpack.c.l.b16 %v195
    %v216 = vunpack.c.l.b16 %v196
    %v217 = vunpack.c.l.b16 %v197
    %v218 = vpack.c.b16 %v215, %v214
    %v219 = vpack.c.b16 %v217, %v216
    %v223 = vsel %vm136, %v209, 0
    %225 = vmatprep.subr.bf16.mxu0 0
    %226 = vmatpush1.bf16.msra.mxu0 %v218
    %227 = vmatprep.subr.bf16.mxu0 0
    %228 = vmatpush1.bf16.msra.mxu0 %v219
    %229 = vmatprep.subr.bf16.mxu0 0
    %230 = vmatpush1.bf16.msra.mxu0 0
    %231 = vmatprep.subr.bf16.mxu0 0
    %232 = vmatpush1.bf16.msra.mxu0 0
    %233 = vmatprep.subr.bf16.mxu0 0
    %234 = vmatpush1.bf16.msra.mxu0 0
    %235 = vmatprep.subr.bf16.mxu0 0
    %236 = vmatpush1.bf16.msra.mxu0 0
    %237 = vmatprep.subr.bf16.mxu0 0
    %238 = vmatpush1.bf16.msra.mxu0 0
    %239 = vmatprep.subr.bf16.mxu0 0
    %240 = vmatpush1.bf16.msra.mxu0 0
    %241 = vmatprep.subr.bf16.mxu0 0
    %242 = vmatpush1.bf16.msra.mxu0 0
    %243 = vmatprep.subr.bf16.mxu0 0
    %244 = vmatpush1.bf16.msra.mxu0 0
    %245 = vmatprep.subr.bf16.mxu0 0
    %246 = vmatpush1.bf16.msra.mxu0 0
    %247 = vmatprep.subr.bf16.mxu0 0
    %248 = vmatpush1.bf16.msra.mxu0 0
    %249 = vmatprep.subr.bf16.mxu0 0
    %250 = vmatpush1.bf16.msra.mxu0 0
    %251 = vmatprep.subr.bf16.mxu0 0
    %252 = vmatpush1.bf16.msra.mxu0 0
    %253 = vmatprep.subr.bf16.mxu0 0
    %254 = vmatpush1.bf16.msra.mxu0 0
    %255 = vmatprep.subr.bf16.mxu0 0
    %256 = vmatpush1.bf16.msra.mxu0 0
    %257 = vmatprep.mubr.bf16.mxu0 0
    %258 = vmatmul.mubr.bf16.gmra.mrb[0].mxu0 %v223
    %v259 = vpop.f32.mrb[0].mxu0
    %v260 = vadd.f32 %v203, %v259
    %v261 = vpop.f32.mrb[0].mxu0
    %v262 = vpop.f32.mrb[0].mxu0
    %v263 = vadd.f32 %v203, %v262
    %v264 = vpop.f32.mrb[0].mxu0
    %265 = vdwg.mxu0
    %v266 = vpack.c.bf16 %v263, %v260
    %v268 = vunpack.c.l.b16 %v266
    %v269 = vunpack.c.h.b16 %v266
    %v270 = vpack.c.b16 %v268, %v268
    %v271 = vpack.c.b16 %v269, %v269
    %274 = vst.msk [vmem:[#allocation12] sm:$0xf] %vm189, %v270
    %275 = vst.msk [vmem:[#allocation12 + $0x4] sm:$0xf] %vm189, %v271
    %v276 = vld [vmem:[#allocation7] sm:$0xf]
    %v277 = vld [vmem:[#allocation7 + $0x4] sm:$0xf]
    %v278 = vld [vmem:[#allocation10] sm:$0xf]
    %v279 = vld [vmem:[#allocation10 + $0x4] sm:$0xf]
    %v280 = vld [vmem:[#allocation10 + $0x8] sm:$0xf]
    %v281 = vld [vmem:[#allocation10 + $0xc] sm:$0xf]
    %v282 = vld [vmem:[%s8] sm:$0x1]
    %v284 = vlaneseq
    %v285 = vshrl.u32 %v284, 7
    %v286 = vsub.s32 0, %v285
    %v287 = vrot.slane %v282, %v286
    %v291 = vunpack.c.l.b16 %v276
    %v292 = vunpack.c.l.b16 %v277
    %v293 = vpack.c.b16 %v292, %v291
    %v298 = vunpack.c.l.b16 %v278
    %v299 = vunpack.c.l.b16 %v279
    %v300 = vunpack.c.l.b16 %v280
    %v301 = vunpack.c.l.b16 %v281
    %v302 = vpack.c.b16 %v299, %v298
    %v303 = vpack.c.b16 %v301, %v300
    %v307 = vsel %vm136, %v293, 0
    %309 = vmatprep.subr.bf16.mxu0 0
    %310 = vmatpush1.bf16.msra.mxu0 %v302
    %311 = vmatprep.subr.bf16.mxu0 0
    %312 = vmatpush1.bf16.msra.mxu0 %v303
    %313 = vmatprep.subr.bf16.mxu0 0
    %314 = vmatpush1.bf16.msra.mxu0 0
    %315 = vmatprep.subr.bf16.mxu0 0
    %316 = vmatpush1.bf16.msra.mxu0 0
    %317 = vmatprep.subr.bf16.mxu0 0
    %318 = vmatpush1.bf16.msra.mxu0 0
    %319 = vmatprep.subr.bf16.mxu0 0
    %320 = vmatpush1.bf16.msra.mxu0 0
    %321 = vmatprep.subr.bf16.mxu0 0
    %322 = vmatpush1.bf16.msra.mxu0 0
    %323 = vmatprep.subr.bf16.mxu0 0
    %324 = vmatpush1.bf16.msra.mxu0 0
    %325 = vmatprep.subr.bf16.mxu0 0
    %326 = vmatpush1.bf16.msra.mxu0 0
    %327 = vmatprep.subr.bf16.mxu0 0
    %328 = vmatpush1.bf16.msra.mxu0 0
    %329 = vmatprep.subr.bf16.mxu0 0
    %330 = vmatpush1.bf16.msra.mxu0 0
    %331 = vmatprep.subr.bf16.mxu0 0
    %332 = vmatpush1.bf16.msra.mxu0 0
    %333 = vmatprep.subr.bf16.mxu0 0
    %334 = vmatpush1.bf16.msra.mxu0 0
    %335 = vmatprep.subr.bf16.mxu0 0
    %336 = vmatpush1.bf16.msra.mxu0 0
    %337 = vmatprep.subr.bf16.mxu0 0
    %338 = vmatpush1.bf16.msra.mxu0 0
    %339 = vmatprep.subr.bf16.mxu0 0
    %340 = vmatpush1.bf16.msra.mxu0 0
    %341 = vmatprep.mubr.bf16.mxu0 0
    %342 = vmatmul.mubr.bf16.gmra.mrb[0].mxu0 %v307
    %v343 = vpop.f32.mrb[0].mxu0
    %v344 = vadd.f32 %v287, %v343
    %v345 = vpop.f32.mrb[0].mxu0
    %v346 = vpop.f32.mrb[0].mxu0
    %v347 = vadd.f32 %v287, %v346
    %v348 = vpop.f32.mrb[0].mxu0
    %349 = vdwg.mxu0
    %v350 = vpack.c.bf16 %v347, %v344
    %v352 = vunpack.c.l.b16 %v350
    %v353 = vunpack.c.h.b16 %v350
    %v354 = vpack.c.b16 %v352, %v352
    %v355 = vpack.c.b16 %v353, %v353
    %358 = vst.msk [vmem:[#allocation14] sm:$0xf] %vm189, %v354
    %359 = vst.msk [vmem:[#allocation14 + $0x4] sm:$0xf] %vm189, %v355
    // Predicated region
    $region58: #{tpu_custom_call.1} parent=1 // pred_check
      _
    $region59: #{tpu_custom_call.1} parent=1 // pred_check_branch
      %361 = sbr.rel (0) target = $region61
    $region60: #{tpu_custom_call.1} parent=1 // pred_region
      %s363 = ssub.s32 128, 128
      %364 = vsyncadd [#allocation4], %s363
      %s365 = sshll.u32 [#allocation11], 4
      %s366 = int_to_ptr.vmem [resolvable:$true] %s365
      %371 = dma.vmem_to_hbm [thread:$0]  %s366, 128, %s9, [#allocation4], 64, 64, 4
    $region61: #{tpu_custom_call.1} parent=1 // pred_fallthru
      _
    // Predicated region
    $region62: #{tpu_custom_call.1} parent=1 // pred_check
      _
    $region63: #{tpu_custom_call.1} parent=1 // pred_check_branch
      %373 = sbr.rel (0) target = $region65
    $region64: #{tpu_custom_call.1} parent=1 // pred_region
      %s375 = ssub.s32 128, 128
      %376 = vsyncadd [#allocation13], %s375
      %s377 = sshll.u32 [#allocation12], 4
      %s378 = int_to_ptr.vmem [resolvable:$true] %s377
      %383 = dma.vmem_to_hbm [thread:$0]  %s378, 128, %s10, [#allocation13], 64, 64, 4
    $region65: #{tpu_custom_call.1} parent=1 // pred_fallthru
      _
    // Predicated region
    $region66: #{tpu_custom_call.1} parent=1 // pred_check
      _
    $region67: #{tpu_custom_call.1} parent=1 // pred_check_branch
      %385 = sbr.rel (0) target = $region69
    $region68: #{tpu_custom_call.1} parent=1 // pred_region
      %s387 = ssub.s32 128, 128
      %388 = vsyncadd [#allocation13], %s387
      %s389 = sshll.u32 [#allocation14], 4
      %s390 = int_to_ptr.vmem [resolvable:$true] %s389
      %395 = dma.vmem_to_hbm [thread:$0]  %s390, 128, %s11, [#allocation13], 64, 64, 4
    $region69: #{tpu_custom_call.1} parent=1 // pred_fallthru
      _
    // Predicated region
    $region70: #{tpu_custom_call.1} parent=1 // pred_check
      _
    $region71: #{tpu_custom_call.1} parent=1 // pred_check_branch
      %397 = sbr.rel (0) target = $region73
    $region72: #{tpu_custom_call.1} parent=1 // pred_region
      %398 = dma.done [#allocation4], 128
    $region73: #{tpu_custom_call.1} parent=1 // pred_fallthru
      _
    // Predicated region
    $region74: #{tpu_custom_call.1} parent=1 // pred_check
      _
    $region75: #{tpu_custom_call.1} parent=1 // pred_check_branch
      %400 = sbr.rel (0) target = $region77
    $region76: #{tpu_custom_call.1} parent=1 // pred_region
      %401 = dma.done [#allocation13], 128
    $region77: #{tpu_custom_call.1} parent=1 // pred_fallthru
      _
    // Predicated region
    $region78: #{tpu_custom_call.1} parent=1 // pred_check
      _
    $region79: #{tpu_custom_call.1} parent=1 // pred_check_branch
      %403 = sbr.rel (0) target = $region81
    $region80: #{tpu_custom_call.1} parent=1 // pred_region
      %404 = dma.done [#allocation13], 128
    $region81: #{tpu_custom_call.1} parent=1 // pred_fallthru
      _
    %405 = vsyncpa [#allocation3], 1
    %406 = vsyncpa [#allocation6], 1
    %407 = vsyncpa [#allocation9], 1
    %408 = vsyncpa [#allocation4], 1
    %409 = vsyncpa [#allocation13], 1

</llo_original>
